<compile_context>
chip_gen: v5e
topology: v5e:2x2
jax: 0.10.0
libtpu: 0.0.40
codegen_flags: <defaults>
</compile_context>

<pallas_src>
import jax
import jax.numpy as jnp
from jax import lax
from jax.experimental import pallas as pl
from jax.experimental.pallas import tpu as pltpu


def _round_up(v, m):
    return ((v + m - 1) // m) * m


def _feature_mask_kernel(batch_ref, mask_ref, x_ref, m_ref, xo_ref, acc_ref):
    ni = pl.program_id(1)                      # node-tile index (reduction axis)
    n_last = pl.num_programs(1) - 1

    # sigmoid(mask) * x   -- per-tile sigmoid of a (1, TF) row is free EUP filler
    s = jax.nn.sigmoid(mask_ref[...].astype(jnp.float32))       # (1, TF)
    xm = x_ref[...].astype(jnp.float32) * s                     # (TN, TF)
    xo_ref[...] = xm.astype(xo_ref.dtype)

    @pl.when(ni == 0)
    def _():
        acc_ref[...] = jnp.zeros_like(acc_ref)

    # global_add_pool as an MXU contraction with the one-hot built in (G, TN)
    # orientation (no compiler-inserted transpose):
    #   m[g, f] += sum_n 1[batch[n] == g] * xm[n, f]
    g_pad = acc_ref.shape[0]
    tn = xm.shape[0]
    gid = lax.broadcasted_iota(jnp.int32, (g_pad, tn), 0)        # (G_pad, TN)
    onehot = (batch_ref[...] == gid).astype(jnp.float32)         # batch_ref is (1, TN)
    acc_ref[...] += lax.dot_general(
        onehot, xm,
        dimension_numbers=(((1,), (0,)), ((), ())),              # (G,TN)@(TN,TF)
        preferred_element_type=jnp.float32,
    )

    @pl.when(ni == n_last)
    def _():
        m_ref[...] = acc_ref[...].astype(m_ref.dtype)


def feature_mask_forward(x, edge_index, batch, train_mask, num_graphs):
    """x: [N, F] float, batch: [N] int, train_mask: [F] float."""
    del edge_index  # unused by Feature_Mask.forward
    n, f = x.shape

    # ---- padded / tiled geometry -------------------------------------------
    f_pad = _round_up(f, 128)                      # lane-dense feature axis
    g_pad = _round_up(max(int(num_graphs), 1), 8)  # sublane-dense graph axis

    n8 = _round_up(n, 8)
    if n8 <= 512:
        tn = n8                                    # single node tile
        n_pad = n8
    else:
        tn = 512                                   # big tiles: ~85%+ of HBM roofline
        n_pad = _round_up(n, tn)

    if f_pad <= 512:
        tf = f_pad
    else:
        tf = 512 if f_pad % 512 == 0 else (256 if f_pad % 256 == 0 else 128)

    # Rough VMEM budget check (double-buffered x in + xo out + acc + m + onehot).
    # At tn=512, tf=512 this is ~5 MiB, comfortably under the 32 MiB limit below
    # and well under v7x's 64 MiB physical VMEM.
    vmem_limit = 32 * 1024 * 1024

    # ---- padded operands ----------------------------------------------------
    x_p = jnp.pad(x, ((0, n_pad - n), (0, f_pad - f)))
    mask_p = jnp.pad(train_mask.reshape(1, f), ((0, 0), (0, f_pad - f)))
    # padded tail rows get batch id -1 -> never match any one-hot column
    batch_p = jnp.pad(batch.astype(jnp.int32), (0, n_pad - n),
                      constant_values=-1).reshape(1, n_pad)

    grid = (f_pad // tf, n_pad // tn)

    m_p, xo_p = pl.pallas_call(
        _feature_mask_kernel,
        out_shape=(
            jax.ShapeDtypeStruct((g_pad, f_pad), x.dtype),   # m = global_add_pool
            jax.ShapeDtypeStruct((n_pad, f_pad), x.dtype),   # masked x
        ),
        grid_spec=pltpu.PrefetchScalarGridSpec(
            num_scalar_prefetch=0,
            grid=grid,
            in_specs=[
                pl.BlockSpec((1, tn), lambda fi, ni: (0, ni)),       # batch ids
                pl.BlockSpec((1, tf), lambda fi, ni: (0, fi)),       # train_mask
                pl.BlockSpec((tn, tf), lambda fi, ni: (ni, fi)),     # x
            ],
            out_specs=(
                pl.BlockSpec((g_pad, tf), lambda fi, ni: (0, fi)),   # m (acc over ni)
                pl.BlockSpec((tn, tf), lambda fi, ni: (ni, fi)),     # masked x
            ),
            scratch_shapes=[pltpu.VMEM((g_pad, tf), jnp.float32)],   # f32 accumulator
        ),
        input_output_aliases={2: 1},   # donate x's HBM buffer to x_masked
        compiler_params=pltpu.CompilerParams(
            dimension_semantics=("parallel", "arbitrary"),
            vmem_limit_bytes=vmem_limit,
        ),
    )(batch_p, mask_p, x_p)

    return m_p[:num_graphs, :f], xo_p[:n, :f]


if __name__ == "__main__":
    key = jax.random.PRNGKey(0)
    k_x, k_mask, k_ei = jax.random.split(key, 3)

    N, F, G = 16, 32, 2  # 16 nodes, 32 features, 2 graphs in the batch
    x = jax.random.normal(k_x, (N, F), dtype=jnp.float32)
    train_mask = jax.random.normal(k_mask, (F,), dtype=jnp.float32)  # nn.Parameter(torch.randn(F))
    batch = jnp.concatenate([jnp.zeros(8, jnp.int32), jnp.ones(8, jnp.int32)])
    edge_index = jax.random.randint(k_ei, (2, 20), 0, N)  # unused, for signature parity

    m, x_masked = feature_mask_forward(x, edge_index, batch, train_mask, G)
    jax.block_until_ready((m, x_masked))

    # pure-JAX reference check
    x_ref = jax.nn.sigmoid(train_mask)[None, :] * x
    m_ref = jax.ops.segment_sum(x_ref, batch, num_segments=G)
    assert x_masked.shape == (N, F) and m.shape == (G, F)
    assert jnp.allclose(x_masked, x_ref, atol=1e-5, rtol=1e-5)
    assert jnp.allclose(m, m_ref, atol=1e-5, rtol=1e-5)

    print("KERNEL_OK")
</pallas_src>

<mosaic_0001>
module attributes {stable_mosaic.version = 11 : i64} {
  func.func @_feature_mask_kernel(%arg0: i32, %arg1: i32, %arg2: memref<1x16xi32, #tpu.memory_space<vmem>>, %arg3: memref<1x128xf32, #tpu.memory_space<vmem>>, %arg4: memref<16x128xf32, #tpu.memory_space<vmem>>, %arg5: memref<8x128xf32, #tpu.memory_space<vmem>>, %arg6: memref<16x128xf32, #tpu.memory_space<vmem>>, %arg7: memref<8x128xf32, #tpu.memory_space<vmem>>) attributes {dimension_semantics = [#tpu.dimension_semantics<parallel>, #tpu.dimension_semantics<arbitrary>], iteration_bounds = array<i64: 1, 1>, scalar_prefetch = 0 : i64, scratch_operands = 1 : i64, tpu.core_type = #tpu.core_type<tc>, window_params = [{transform_indices = @transform_0, window_bounds = array<i64: 1, 16>}, {transform_indices = @transform_1, window_bounds = array<i64: 1, 128>}, {transform_indices = @transform_2, window_bounds = array<i64: 16, 128>}, {transform_indices = @transform_3, window_bounds = array<i64: 8, 128>}, {transform_indices = @transform_4, window_bounds = array<i64: 16, 128>}]} {
    %c0 = arith.constant 0 : index
    %c0_0 = arith.constant 0 : index
    %0 = vector.load %arg3[%c0, %c0_0] : memref<1x128xf32, #tpu.memory_space<vmem>>, vector<1x128xf32>
    %1 = arith.negf %0 : vector<1x128xf32>
    %2 = math.exp %1 : vector<1x128xf32>
    %cst = arith.constant 1.000000e+00 : f32
    %3 = vector.broadcast %cst : f32 to vector<1x128xf32>
    %4 = arith.addf %3, %2 : vector<1x128xf32>
    %5 = arith.divf %3, %4 : vector<1x128xf32>
    %c0_1 = arith.constant 0 : index
    %c0_2 = arith.constant 0 : index
    %6 = vector.load %arg4[%c0_1, %c0_2] : memref<16x128xf32, #tpu.memory_space<vmem>>, vector<16x128xf32>
    %7 = vector.broadcast %5 : vector<1x128xf32> to vector<16x128xf32>
    %8 = arith.mulf %6, %7 : vector<16x128xf32>
    %c0_3 = arith.constant 0 : index
    %c0_4 = arith.constant 0 : index
    %9 = vector.load %arg6[%c0_3, %c0_4] : memref<16x128xf32, #tpu.memory_space<vmem>>, vector<16x128xf32>
    tpu.vector_store %arg6[%c0_3, %c0_4], %8 {strides = array<i32>} : memref<16x128xf32, #tpu.memory_space<vmem>>, vector<16x128xf32>,
    %c0_i32 = arith.constant 0 : i32
    %10 = arith.cmpi eq, %arg1, %c0_i32 : i32
    %11 = arith.extui %10 : i1 to i32
    %c0_i32_5 = arith.constant 0 : i32
    %12 = arith.cmpi ne, %11, %c0_i32_5 : i32
    scf.if %12 {
      %cst_15 = arith.constant 0.000000e+00 : f32
      %26 = vector.broadcast %cst_15 : f32 to vector<8x128xf32>
      %c0_16 = arith.constant 0 : index
      %c0_17 = arith.constant 0 : index
      %27 = vector.load %arg7[%c0_16, %c0_17] : memref<8x128xf32, #tpu.memory_space<vmem>>, vector<8x128xf32>
      tpu.vector_store %arg7[%c0_16, %c0_17], %26 {strides = array<i32>} : memref<8x128xf32, #tpu.memory_space<vmem>>, vector<8x128xf32>,
    } else {
    }
    %13 = tpu.iota {dimensions = array<i32: 0>} : vector<8x16xi32>
    %c0_6 = arith.constant 0 : index
    %c0_7 = arith.constant 0 : index
    %14 = vector.load %arg2[%c0_6, %c0_7] : memref<1x16xi32, #tpu.memory_space<vmem>>, vector<1x16xi32>
    %15 = vector.broadcast %14 : vector<1x16xi32> to vector<8x16xi32>
    %16 = arith.cmpi eq, %15, %13 : vector<8x16xi32>
    %17 = arith.extui %16 : vector<8x16xi1> to vector<8x16xi32>
    %18 = arith.sitofp %17 : vector<8x16xi32> to vector<8x16xf32>
    %c0_8 = arith.constant 0 : index
    %c0_9 = arith.constant 0 : index
    %19 = vector.load %arg7[%c0_8, %c0_9] : memref<8x128xf32, #tpu.memory_space<vmem>>, vector<8x128xf32>
    %cst_10 = arith.constant dense<0.000000e+00> : vector<8x128xf32>
    %20 = tpu.matmul %18, %8, %cst_10 {dimension_numbers = #tpu.dot_dimension_numbers<[1], [0], [0], [1], [0, 0, 1, 1], [], []>} : vector<8x16xf32>, vector<16x128xf32>, vector<8x128xf32> -> vector<8x128xf32>
    %21 = arith.addf %19, %20 : vector<8x128xf32>
    %c0_11 = arith.constant 0 : index
    %c0_12 = arith.constant 0 : index
    %22 = vector.load %arg7[%c0_11, %c0_12] : memref<8x128xf32, #tpu.memory_space<vmem>>, vector<8x128xf32>
    tpu.vector_store %arg7[%c0_11, %c0_12], %21 {strides = array<i32>} : memref<8x128xf32, #tpu.memory_space<vmem>>, vector<8x128xf32>,
    %c0_i32_13 = arith.constant 0 : i32
    %23 = arith.cmpi eq, %arg1, %c0_i32_13 : i32
    %24 = arith.extui %23 : i1 to i32
    %c0_i32_14 = arith.constant 0 : i32
    %25 = arith.cmpi ne, %24, %c0_i32_14 : i32
    scf.if %25 {
      %c0_15 = arith.constant 0 : index
      %c0_16 = arith.constant 0 : index
      %26 = vector.load %arg7[%c0_15, %c0_16] : memref<8x128xf32, #tpu.memory_space<vmem>>, vector<8x128xf32>
      %c0_17 = arith.constant 0 : index
      %c0_18 = arith.constant 0 : index
      %27 = vector.load %arg5[%c0_17, %c0_18] : memref<8x128xf32, #tpu.memory_space<vmem>>, vector<8x128xf32>
      tpu.vector_store %arg5[%c0_17, %c0_18], %26 {strides = array<i32>} : memref<8x128xf32, #tpu.memory_space<vmem>>, vector<8x128xf32>,
    } else {
    }
    return
  }
  func.func @transform_0(%arg0: i32, %arg1: i32) -> (i32, i32) {
    %c0_i32 = arith.constant 0 : i32
    %c0_i32_0 = arith.constant 0 : i32
    return %c0_i32, %arg1 : i32, i32
  }
  func.func @transform_1(%arg0: i32, %arg1: i32) -> (i32, i32) {
    %c0_i32 = arith.constant 0 : i32
    %c0_i32_0 = arith.constant 0 : i32
    return %c0_i32, %arg0 : i32, i32
  }
  func.func @transform_2(%arg0: i32, %arg1: i32) -> (i32, i32) {
    %c0_i32 = arith.constant 0 : i32
    return %arg1, %arg0 : i32, i32
  }
  func.func @transform_3(%arg0: i32, %arg1: i32) -> (i32, i32) {
    %c0_i32 = arith.constant 0 : i32
    %c0_i32_0 = arith.constant 0 : i32
    return %c0_i32, %arg0 : i32, i32
  }
  func.func @transform_4(%arg0: i32, %arg1: i32) -> (i32, i32) {
    %c0_i32 = arith.constant 0 : i32
    return %arg1, %arg0 : i32, i32
  }
}

</mosaic_0001>

<llo_original>
// kernel: tpu_custom_call.1
$region0: #{tpu_custom_call.1}
  #allocation0 [shape = 'u32[]', space=smem, size = 0x4, offset = 0x4, fixed_abs, tag = 'smem constant byte address 0x4 - core index']
  #allocation1 [shape = 'u32[72,128]{1,0:T(1,128)}', space=vmem, size = 0x9000, scoped, tag = 'internal scratch']
  #allocation2 [shape = 'f32[8,128]{1,0:T(8,128)}', space=vmem, size = 0x1000, scoped, tag = 'scratch operand']
  %s0 = inlined_call_operand.vmem [shape: s32[1,16], index: 0, kind: input, shape index: {}]
  %s1 = inlined_call_operand.vmem [shape: f32[1,128], index: 1, kind: input, shape index: {}]
  %s2 = inlined_call_operand.hbm [shape: f32[16,128], index: 2, kind: input, shape index: {}, may-alias: {2,4}]
  %s3 = inlined_call_operand.hbm [shape: f32[8,128], index: 3, kind: output, shape index: {0}]
  %s4 = inlined_call_operand.hbm [shape: f32[16,128], index: 4, kind: output, shape index: {1}, may-alias: {2,4}]
  %5 = xla_tuple %s3, %s4
  %s6 = sld [smem:[#allocation0]]
  $region42: #{tpu_custom_call.1} parent=0
    _
  %s8 = ssub.s32 1, %s6
  %s9 = scalar_select 0, %s8, %s6
  $region1: #{tpu_custom_call.1} parent=0
    #allocation3 [shape = 'u8[8192]{0}', space=vmem, size = 0x2000, scoped, tag = 'input window, operand 2, single buffered']
    #allocation4 [shape = 's32[1]{0}', space=sflag, size = 0x4, scoped, tag = 'scoped memory for tpu_custom_call.1']
    #allocation5 [shape = 's32[1]{0}', space=sflag, size = 0x4, scoped, tag = 'scoped memory for tpu_custom_call.1']
    #allocation6 [shape = 'u8[4096]{0}', space=vmem, size = 0x1000, scoped, tag = 'output window, operand 0, single buffered']
    #allocation7 [shape = 'u8[8192]{0}', space=vmem, size = 0x2000, scoped, tag = 'output window, operand 1, single buffered']
    #allocation8 [shape = 's32[1]{0}', space=sflag, size = 0x4, scoped, tag = 'scoped memory for tpu_custom_call.1']
    %10 = vsyncpa [#allocation4], 0
    %11 = vsyncpa [#allocation5], 0
    %12 = vsyncpa [#allocation8], 0
    // Predicated region
    $region2: #{tpu_custom_call.1} parent=1 // pred_check
      _
    $region3: #{tpu_custom_call.1} parent=1 // pred_check_branch
      %14 = sbr.rel (0) target = $region5
    $region4: #{tpu_custom_call.1} parent=1 // pred_region
      _
    $region5: #{tpu_custom_call.1} parent=1 // pred_fallthru
      _
    // Predicated region
    $region6: #{tpu_custom_call.1} parent=1 // pred_check
      _
    $region7: #{tpu_custom_call.1} parent=1 // pred_check_branch
      %16 = sbr.rel (0) target = $region9
    $region8: #{tpu_custom_call.1} parent=1 // pred_region
      _
    $region9: #{tpu_custom_call.1} parent=1 // pred_fallthru
      _
    // Predicated region
    $region10: #{tpu_custom_call.1} parent=1 // pred_check
      _
    $region11: #{tpu_custom_call.1} parent=1 // pred_check_branch
      %18 = sbr.rel (0) target = $region13
    $region12: #{tpu_custom_call.1} parent=1 // pred_region
      %20 = vsyncadd [#allocation4], 0
      %s21 = sshll.u32 %s2, 4
      %s22 = int_to_ptr.hbm [resolvable:$true] %s21
      %s23 = sshll.u32 [#allocation3], 4
      %s24 = int_to_ptr.vmem [resolvable:$true] %s23
      %29 = dma.hbm_to_vmem [thread:$0]  %s22, 256, %s24, [#allocation4], 128, 128, 8
    $region13: #{tpu_custom_call.1} parent=1 // pred_fallthru
      _
    // Predicated region
    $region14: #{tpu_custom_call.1} parent=1 // pred_check
      _
    $region15: #{tpu_custom_call.1} parent=1 // pred_check_branch
      %31 = sbr.rel (0) target = $region17
    $region16: #{tpu_custom_call.1} parent=1 // pred_region
      %33 = dma.done [#allocation4], 256
    $region17: #{tpu_custom_call.1} parent=1 // pred_fallthru
      _
    %v34 = vld [vmem:[%s1] sm:$0x1]
    %v35 = vxor.u32 %v34, 2147483648
    %v36 = vmul.f32 %v35, 1.442695
    %v37 = vpow.pop %v36
    %v38 = vadd.f32 %v37, 1.0
    %v39 = vrcp.pop %v38
    %v40 = vmul.f32 %v38, %v39
    %v41 = vsub.f32 1.0, %v40
    %v42 = vmul.f32 %v39, %v41
    %v43 = vadd.f32 %v39, %v42
    %vm44 = vweird.f32 %v38
    %vm45 = vweird.f32 %v39
    %vm46 = vmor %vm44, %vm45
    %v47 = vsel %vm46, %v39, %v43
    %v48 = vand.u32 2147483647, %v38
    %vm49 = vcmp.eq.f32.partialorder %v48, 8.507059e+37
    %v50 = vand.u32 %v38, 2147483648
    %v51 = vor.u32 1.1754944e-38, %v50
    %v52 = vsel %vm49, %v51, %v47
    %v53 = vmul.f32 1.0, %v52
    %v54 = vld [vmem:[#allocation3] sm:$0xff]
    %v55 = vld [vmem:[#allocation3 + $0x8] sm:$0xff]
    %v57 = vperm.slane %v53, 0
    %v59 = vmul.f32 %v54, %v57
    %v60 = vmul.f32 %v55, %v57
    %61 = vst [vmem:[#allocation7] sm:$0xff] %v59
    %62 = vst [vmem:[#allocation7 + $0x8] sm:$0xff] %v60
    %p63 = scmp.eq.s32.totalorder 0, 0
    // Predicated region
    $region18: #{tpu_custom_call.1} parent=1 // pred_check
      %p64 = pneg %p63
    $region19: #{tpu_custom_call.1} parent=1 // pred_check_branch
      %66 = sbr.rel (%p64) target = $region21
    $region20: #{tpu_custom_call.1} parent=1 // pred_region
      %67 = vst [vmem:[#allocation2] sm:$0xff] 0.0
    $region21: #{tpu_custom_call.1} parent=1 // pred_fallthru
      _
    %v68 = vlaneseq
    %v69 = vshrl.u32 %v68, 7
    %v70 = vld [vmem:[%s0] sm:$0x1]
    %v71 = vperm.slane %v70, 0
    %vm72 = vcmp.eq.s32.totalorder %v71, %v69
    %v73 = vsel %vm72, 1, 0
    %v74 = vcvt.s32.f32 %v73
    %v75 = vld [vmem:[#allocation2] sm:$0xff]
    %vm76 = vcmask 130048
    %v78 = vsel %vm76, %v74, 0
    %80 = vmatpush.msra.mxu0 0.0
    %81 = vmatpush.msra.mxu0 0.0
    %82 = vmatpush.msra.mxu0 0.0
    %83 = vmatpush.msra.mxu0 0.0
    %84 = vmatpush.msra.mxu0 0.0
    %85 = vmatpush.msra.mxu0 0.0
    %86 = vmatpush.msra.mxu0 0.0
    %87 = vmatpush.msra.mxu0 0.0
    %88 = vmatpush.msra.mxu0 0.0
    %89 = vmatpush.msra.mxu0 0.0
    %90 = vmatpush.msra.mxu0 0.0
    %91 = vmatpush.msra.mxu0 0.0
    %92 = vmatpush.msra.mxu0 0.0
    %93 = vmatpush.msra.mxu0 0.0
    %94 = vmatpush.msra.mxu0 %v60
    %95 = vmatpush.msra.mxu0 %v59
    %96 = vmatmul.f32.gmra.mxu0 %v78
    %v97 = vpop.f32.mrf.mxu0
    %v98 = vadd.f32 0.0, %v97
    %99 = vdwg.mxu0
    %v100 = vadd.f32 %v75, %v98
    %101 = vst [vmem:[#allocation2] sm:$0xff] %v100
    // Predicated region
    $region22: #{tpu_custom_call.1} parent=1 // pred_check
      %p102 = pneg %p63
    $region23: #{tpu_custom_call.1} parent=1 // pred_check_branch
      %104 = sbr.rel (%p102) target = $region25
    $region24: #{tpu_custom_call.1} parent=1 // pred_region
      %v105 = vld [vmem:[#allocation2] sm:$0xff]
      %106 = vst [vmem:[#allocation6] sm:$0xff] %v105
    $region25: #{tpu_custom_call.1} parent=1 // pred_fallthru
      _
    // Predicated region
    $region26: #{tpu_custom_call.1} parent=1 // pred_check
      _
    $region27: #{tpu_custom_call.1} parent=1 // pred_check_branch
      %108 = sbr.rel (0) target = $region29
    $region28: #{tpu_custom_call.1} parent=1 // pred_region
      %110 = vsyncadd [#allocation5], 0
      %s112 = sshll.u32 [#allocation6], 4
      %s113 = int_to_ptr.vmem [resolvable:$true] %s112
      %s114 = sshll.u32 %s3, 4
      %s115 = int_to_ptr.hbm [resolvable:$true] %s114
      %117 = dma.vmem_to_hbm [thread:$0]  %s113, 128, %s115, [#allocation5]
    $region29: #{tpu_custom_call.1} parent=1 // pred_fallthru
      _
    // Predicated region
    $region30: #{tpu_custom_call.1} parent=1 // pred_check
      _
    $region31: #{tpu_custom_call.1} parent=1 // pred_check_branch
      %119 = sbr.rel (0) target = $region33
    $region32: #{tpu_custom_call.1} parent=1 // pred_region
      %121 = vsyncadd [#allocation8], 0
      %s122 = sshll.u32 [#allocation7], 4
      %s123 = int_to_ptr.vmem [resolvable:$true] %s122
      %s124 = sshll.u32 %s4, 4
      %s125 = int_to_ptr.hbm [resolvable:$true] %s124
      %130 = dma.vmem_to_hbm [thread:$0]  %s123, 256, %s125, [#allocation8], 128, 128, 8
    $region33: #{tpu_custom_call.1} parent=1 // pred_fallthru
      _
    // Predicated region
    $region34: #{tpu_custom_call.1} parent=1 // pred_check
      _
    $region35: #{tpu_custom_call.1} parent=1 // pred_check_branch
      %132 = sbr.rel (0) target = $region37
    $region36: #{tpu_custom_call.1} parent=1 // pred_region
      %134 = dma.done [#allocation5], 128
    $region37: #{tpu_custom_call.1} parent=1 // pred_fallthru
      _
    // Predicated region
    $region38: #{tpu_custom_call.1} parent=1 // pred_check
      _
    $region39: #{tpu_custom_call.1} parent=1 // pred_check_branch
      %136 = sbr.rel (0) target = $region41
    $region40: #{tpu_custom_call.1} parent=1 // pred_region
      %138 = dma.done [#allocation8], 256
    $region41: #{tpu_custom_call.1} parent=1 // pred_fallthru
      _
    %139 = vsyncpa [#allocation4], 1
    %140 = vsyncpa [#allocation5], 1
    %141 = vsyncpa [#allocation8], 1

</llo_original>
